<compile_context>
chip_gen: v5e
topology: v5e:2x2
jax: 0.10.0
libtpu: 0.0.40
codegen_flags: <defaults>
</compile_context>

<pallas_src>
import functools

import jax
import jax.numpy as jnp
from jax.experimental import pallas as pl
from jax.experimental.pallas import tpu as pltpu


# ----------------------------------------------------------------------------
# Kernel
# ----------------------------------------------------------------------------
def _mlp2_kernel(
    xd_ref, xv_ref,                       # activations (batch tile), f32 HBM dtype
    w1dp_ref, w1vp_ref, b1_ref,           # fused first layers: (d1,256),(d2,256),(1,256)
    w2s_ref, b2_ref,                      # fused second layer: (256,128),(1,128)
    w3_ref, b3_ref,                       # fc layer 1: (128,128),(1,128)
    w4p_ref, b4p_ref,                     # fc layer 2 padded to 128 lanes
    out_ref,                              # (TB, 128) lane-dense slab
):
    f32 = jnp.float32
    cd = w1dp_ref.dtype                   # compute dtype (f32 or bf16)
    relu = lambda t: jnp.maximum(t, 0.0)

    # Cast the inputs to the compute dtype *inside* the kernel (no extra HBM
    # pass in the wrapper); MXU accumulates in f32 via preferred_element_type.
    xd = xd_ref[...].astype(cd)           # (TB, d1)
    xv = xv_ref[...].astype(cd)           # (TB, d2)

    # Both first layers fused into one (TB, 256) activation:
    #   [h1d | h1v] = relu(xd @ [W1d | 0] + xv @ [0 | W1v] + [b1d | b1v])
    h1 = relu(jnp.dot(xd, w1dp_ref[...], preferred_element_type=f32)
              + jnp.dot(xv, w1vp_ref[...], preferred_element_type=f32)
              + b1_ref[...]).astype(cd)   # (TB, 256)

    # Second layers + torch.cat fused into one K=256 matmul against the
    # block-diagonal weight:  comb == cat(h1d@W2d+b2d, h1v@W2v+b2v) post-ReLU.
    comb = relu(jnp.dot(h1, w2s_ref[...], preferred_element_type=f32)
                + b2_ref[...]).astype(cd)  # (TB, 128)

    # fc: Linear(128,128) -> ReLU -> Linear(128, 128-padded) -> Sigmoid
    h3 = relu(jnp.dot(comb, w3_ref[...], preferred_element_type=f32)
              + b3_ref[...]).astype(cd)    # (TB, 128)
    logits = jnp.dot(h3, w4p_ref[...], preferred_element_type=f32) + b4p_ref[...]
    out_ref[...] = jax.nn.sigmoid(logits).astype(out_ref.dtype)


# ----------------------------------------------------------------------------
# Wrapper
# ----------------------------------------------------------------------------
def _round_up(n, m):
    return (n + m - 1) // m * m


def _choose_batch_tile(B, block_b):
    """Batch tile: multiple of 16 rows (bf16 sublane packing), capped at the
    (rounded) block_b, split in two when a large batch would otherwise be a
    single grid step (so v7x's two TensorCores both get work)."""
    block_b = max(16, _round_up(block_b, 16))
    tb = min(block_b, _round_up(B, 16))
    if B >= 2048 and (B + tb - 1) // tb < 2:
        tb = _round_up((B + 1) // 2, 16)
    return tb


@functools.partial(jax.jit, static_argnames=("output_dim", "block_b", "out_dtype"))
def mlp_2_input_forward(x_dist, x_vec, params, *, output_dim,
                        block_b=4096, out_dtype=jnp.bfloat16):
    """params: packed dict from pack_params(); output_dim: true output width.

    out_dtype controls the in-kernel output-slab store dtype (bf16 halves the
    dominant HBM writeback); the returned array is always f32.
    """
    B, d1 = x_dist.shape
    d2 = x_vec.shape[1]

    tb = _choose_batch_tile(B, block_b)
    n_tiles = (B + tb - 1) // tb          # ragged last tile handled by Pallas

    w_names = ("w1dp", "w1vp", "b1", "w2s", "b2", "w3", "b3", "w4p", "b4p")
    w_args = tuple(params[k] for k in w_names)

    x_map = lambda i: (i, 0)              # batch-tiled activations / output
    w_map = lambda i: (0, 0)              # constant -> weights DMA'd once, resident

    in_specs = (
        [pl.BlockSpec((tb, d1), x_map), pl.BlockSpec((tb, d2), x_map)]
        + [pl.BlockSpec(w.shape, w_map) for w in w_args]
    )
    out_spec = pl.BlockSpec((tb, 128), x_map)    # lane-dense output slab

    # Advisory cost estimate for XLA's scheduler.
    flops = 2 * B * (d1 * 256 + d2 * 256 + 256 * 128 + 128 * 128 + 128 * 128)
    bytes_accessed = (
        x_dist.size * x_dist.dtype.itemsize
        + x_vec.size * x_vec.dtype.itemsize
        + sum(int(w.size) * w.dtype.itemsize for w in w_args)
        + B * 128 * jnp.dtype(out_dtype).itemsize
    )
    cost = pl.CostEstimate(flops=flops, transcendentals=B * 128,
                           bytes_accessed=bytes_accessed)

    out_slab = pl.pallas_call(
        _mlp2_kernel,
        out_shape=jax.ShapeDtypeStruct((B, 128), out_dtype),
        grid=(n_tiles,),
        in_specs=in_specs,
        out_specs=out_spec,
        compiler_params=pltpu.CompilerParams(
            dimension_semantics=("parallel",),           # megacore-shard tiles
            vmem_limit_bytes=48 * 1024 * 1024,           # portable big-tile headroom
        ),
        cost_estimate=cost,
    )(x_dist, x_vec, *w_args)

    return out_slab[:, :output_dim].astype(jnp.float32)


# ----------------------------------------------------------------------------
# Parameters (synthetic init, torch-equivalent layout) + packing
# ----------------------------------------------------------------------------
def init_raw_params(key, input_dim1, input_dim2, output_dim):
    """Weights stored (in, out); biases (1, out). Deterministic synthetic init."""
    ks = jax.random.split(key, 12)
    s = 0.05
    w = lambda k, shape: jax.random.normal(k, shape, dtype=jnp.float32) * s
    return {
        "w1d": w(ks[0], (input_dim1, 128)), "b1d": w(ks[1], (1, 128)),
        "w2d": w(ks[2], (128, 64)),         "b2d": w(ks[3], (1, 64)),
        "w1v": w(ks[4], (input_dim2, 128)), "b1v": w(ks[5], (1, 128)),
        "w2v": w(ks[6], (128, 64)),         "b2v": w(ks[7], (1, 64)),
        "w3":  w(ks[8], (128, 128)),        "b3":  w(ks[9], (1, 128)),
        "w4":  w(ks[10], (128, output_dim)), "b4": w(ks[11], (1, output_dim)),
    }


def pack_params(raw, compute_dtype=jnp.bfloat16):
    """Repack for the kernel:
      * first layers of both branches widened to 256 output lanes
        ([W1d | 0], [0 | W1v], [b1d | b1v]),
      * second layers + torch.cat fused into one block-diagonal (256,128) weight,
      * final layer padded to 128 lanes (extra cols sliced outside),
      * weights cast to the compute dtype (biases stay f32; zero padding is
        exact in bf16 so the fusion introduces no extra error)."""
    f32 = jnp.float32
    cd = compute_dtype
    d1 = raw["w1d"].shape[0]
    d2 = raw["w1v"].shape[0]
    od = raw["w4"].shape[1]

    w1dp = jnp.zeros((d1, 256), f32).at[:, :128].set(raw["w1d"])
    w1vp = jnp.zeros((d2, 256), f32).at[:, 128:].set(raw["w1v"])
    b1 = jnp.concatenate([raw["b1d"], raw["b1v"]], axis=1)           # (1, 256)

    w2s = (jnp.zeros((256, 128), f32)
           .at[:128, :64].set(raw["w2d"])
           .at[128:, 64:].set(raw["w2v"]))                           # block-diag
    b2 = jnp.concatenate([raw["b2d"], raw["b2v"]], axis=1)           # (1, 128)

    w4p = jnp.zeros((128, 128), f32).at[:, :od].set(raw["w4"])
    b4p = jnp.zeros((1, 128), f32).at[:, :od].set(raw["b4"])

    return {
        "w1dp": w1dp.astype(cd), "w1vp": w1vp.astype(cd), "b1": b1,
        "w2s": w2s.astype(cd), "b2": b2,
        "w3": raw["w3"].astype(cd), "b3": raw["b3"],
        "w4p": w4p.astype(cd), "b4p": b4p,
    }


def reference_forward(x_dist, x_vec, raw):
    """Pure-JAX f32 reference mirroring the PyTorch module."""
    relu = lambda t: jnp.maximum(t, 0.0)
    od = relu(x_dist @ raw["w1d"] + raw["b1d"])
    od = relu(od @ raw["w2d"] + raw["b2d"])
    ov = relu(x_vec @ raw["w1v"] + raw["b1v"])
    ov = relu(ov @ raw["w2v"] + raw["b2v"])
    combined = jnp.concatenate([od, ov], axis=1)
    h = relu(combined @ raw["w3"] + raw["b3"])
    return jax.nn.sigmoid(h @ raw["w4"] + raw["b4"])


# ----------------------------------------------------------------------------
# Demo / self-check
# ----------------------------------------------------------------------------
if __name__ == "__main__":
    B = 8
    input_dim1 = 16     # distance-feature dim
    input_dim2 = 32     # vector-feature dim
    output_dim = 8

    key = jax.random.PRNGKey(0)
    k_params, k_xd, k_xv = jax.random.split(key, 3)

    raw = init_raw_params(k_params, input_dim1, input_dim2, output_dim)
    x_dist = jax.random.normal(k_xd, (B, input_dim1), dtype=jnp.float32)
    x_vec = jax.random.normal(k_xv, (B, input_dim2), dtype=jnp.float32)

    ref = reference_forward(x_dist, x_vec, raw)

    # Exact path: f32 weights + f32 output slab -> checks the fused-concat /
    # block-diagonal repack and padded-output logic bit-for-bit (up to rounding).
    p32 = pack_params(raw, jnp.float32)
    out32 = mlp_2_input_forward(x_dist, x_vec, p32, output_dim=output_dim,
                                out_dtype=jnp.float32)
    out32 = jax.block_until_ready(out32)
    assert out32.shape == (B, output_dim)
    assert jnp.allclose(out32, ref, atol=1e-5, rtol=1e-5), "f32 mismatch vs reference"

    # Fast path: bf16 weights/activations (f32 MXU accumulation, f32 ReLU /
    # sigmoid) + bf16 output slab. Results drift slightly from the f32
    # reference by construction.
    pbf = pack_params(raw, jnp.bfloat16)
    outbf = mlp_2_input_forward(x_dist, x_vec, pbf, output_dim=output_dim,
                                out_dtype=jnp.bfloat16)
    outbf = jax.block_until_ready(outbf)
    assert outbf.shape == (B, output_dim)
    assert jnp.allclose(outbf, ref, atol=3e-2), "bf16 mismatch vs reference"

    print("KERNEL_OK")
</pallas_src>

<mosaic_0001>
module attributes {stable_mosaic.version = 11 : i64} {
  func.func @_mlp2_kernel(%arg0: i32, %arg1: memref<16x16xf32, #tpu.memory_space<vmem>>, %arg2: memref<16x32xf32, #tpu.memory_space<vmem>>, %arg3: memref<16x256xf32, #tpu.memory_space<vmem>>, %arg4: memref<32x256xf32, #tpu.memory_space<vmem>>, %arg5: memref<1x256xf32, #tpu.memory_space<vmem>>, %arg6: memref<256x128xf32, #tpu.memory_space<vmem>>, %arg7: memref<1x128xf32, #tpu.memory_space<vmem>>, %arg8: memref<128x128xf32, #tpu.memory_space<vmem>>, %arg9: memref<1x128xf32, #tpu.memory_space<vmem>>, %arg10: memref<128x128xf32, #tpu.memory_space<vmem>>, %arg11: memref<1x128xf32, #tpu.memory_space<vmem>>, %arg12: memref<16x128xf32, #tpu.memory_space<vmem>>) attributes {dimension_semantics = [#tpu.dimension_semantics<parallel>], iteration_bounds = array<i64: 1>, scalar_prefetch = 0 : i64, scratch_operands = 0 : i64, tpu.core_type = #tpu.core_type<tc>, window_params = [{transform_indices = @transform_0, window_bounds = array<i64: 16, 16>}, {transform_indices = @transform_1, window_bounds = array<i64: 16, 32>}, {pipeline_mode = #tpu.pipeline_mode<synchronous>, transform_indices = @transform_2, window_bounds = array<i64: 16, 256>}, {pipeline_mode = #tpu.pipeline_mode<synchronous>, transform_indices = @transform_3, window_bounds = array<i64: 32, 256>}, {pipeline_mode = #tpu.pipeline_mode<synchronous>, transform_indices = @transform_4, window_bounds = array<i64: 1, 256>}, {pipeline_mode = #tpu.pipeline_mode<synchronous>, transform_indices = @transform_5, window_bounds = array<i64: 256, 128>}, {pipeline_mode = #tpu.pipeline_mode<synchronous>, transform_indices = @transform_6, window_bounds = array<i64: 1, 128>}, {pipeline_mode = #tpu.pipeline_mode<synchronous>, transform_indices = @transform_7, window_bounds = array<i64: 128, 128>}, {pipeline_mode = #tpu.pipeline_mode<synchronous>, transform_indices = @transform_8, window_bounds = array<i64: 1, 128>}, {pipeline_mode = #tpu.pipeline_mode<synchronous>, transform_indices = @transform_9, window_bounds = array<i64: 128, 128>}, {pipeline_mode = #tpu.pipeline_mode<synchronous>, transform_indices = @transform_10, window_bounds = array<i64: 1, 128>}, {transform_indices = @transform_11, window_bounds = array<i64: 16, 128>}]} {
    %c0 = arith.constant 0 : index
    %c0_0 = arith.constant 0 : index
    %0 = vector.load %arg1[%c0, %c0_0] : memref<16x16xf32, #tpu.memory_space<vmem>>, vector<16x16xf32>
    %c0_1 = arith.constant 0 : index
    %c0_2 = arith.constant 0 : index
    %1 = vector.load %arg2[%c0_1, %c0_2] : memref<16x32xf32, #tpu.memory_space<vmem>>, vector<16x32xf32>
    %c0_3 = arith.constant 0 : index
    %c0_4 = arith.constant 0 : index
    %2 = vector.load %arg3[%c0_3, %c0_4] : memref<16x256xf32, #tpu.memory_space<vmem>>, vector<16x256xf32>
    %cst = arith.constant dense<0.000000e+00> : vector<16x256xf32>
    %3 = tpu.matmul %0, %2, %cst {dimension_numbers = #tpu.dot_dimension_numbers<[1], [0], [0], [1], [0, 0, 1, 1], [], []>} : vector<16x16xf32>, vector<16x256xf32>, vector<16x256xf32> -> vector<16x256xf32>
    %c0_5 = arith.constant 0 : index
    %c0_6 = arith.constant 0 : index
    %4 = vector.load %arg4[%c0_5, %c0_6] : memref<32x256xf32, #tpu.memory_space<vmem>>, vector<32x256xf32>
    %cst_7 = arith.constant dense<0.000000e+00> : vector<16x256xf32>
    %5 = tpu.matmul %1, %4, %cst_7 {dimension_numbers = #tpu.dot_dimension_numbers<[1], [0], [0], [1], [0, 0, 1, 1], [], []>} : vector<16x32xf32>, vector<32x256xf32>, vector<16x256xf32> -> vector<16x256xf32>
    %6 = arith.addf %3, %5 : vector<16x256xf32>
    %c0_8 = arith.constant 0 : index
    %c0_9 = arith.constant 0 : index
    %7 = vector.load %arg5[%c0_8, %c0_9] : memref<1x256xf32, #tpu.memory_space<vmem>>, vector<1x256xf32>
    %8 = vector.broadcast %7 : vector<1x256xf32> to vector<16x256xf32>
    %9 = arith.addf %6, %8 : vector<16x256xf32>
    %cst_10 = arith.constant 0.000000e+00 : f32
    %10 = vector.broadcast %cst_10 : f32 to vector<16x256xf32>
    %11 = arith.maximumf %9, %10 : vector<16x256xf32>
    %c0_11 = arith.constant 0 : index
    %c0_12 = arith.constant 0 : index
    %12 = vector.load %arg6[%c0_11, %c0_12] : memref<256x128xf32, #tpu.memory_space<vmem>>, vector<256x128xf32>
    %cst_13 = arith.constant dense<0.000000e+00> : vector<16x128xf32>
    %13 = tpu.matmul %11, %12, %cst_13 {dimension_numbers = #tpu.dot_dimension_numbers<[1], [0], [0], [1], [0, 0, 1, 1], [], []>} : vector<16x256xf32>, vector<256x128xf32>, vector<16x128xf32> -> vector<16x128xf32>
    %c0_14 = arith.constant 0 : index
    %c0_15 = arith.constant 0 : index
    %14 = vector.load %arg7[%c0_14, %c0_15] : memref<1x128xf32, #tpu.memory_space<vmem>>, vector<1x128xf32>
    %15 = vector.broadcast %14 : vector<1x128xf32> to vector<16x128xf32>
    %16 = arith.addf %13, %15 : vector<16x128xf32>
    %cst_16 = arith.constant 0.000000e+00 : f32
    %17 = vector.broadcast %cst_16 : f32 to vector<16x128xf32>
    %18 = arith.maximumf %16, %17 : vector<16x128xf32>
    %c0_17 = arith.constant 0 : index
    %c0_18 = arith.constant 0 : index
    %19 = vector.load %arg8[%c0_17, %c0_18] : memref<128x128xf32, #tpu.memory_space<vmem>>, vector<128x128xf32>
    %cst_19 = arith.constant dense<0.000000e+00> : vector<16x128xf32>
    %20 = tpu.matmul %18, %19, %cst_19 {dimension_numbers = #tpu.dot_dimension_numbers<[1], [0], [0], [1], [0, 0, 1, 1], [], []>} : vector<16x128xf32>, vector<128x128xf32>, vector<16x128xf32> -> vector<16x128xf32>
    %c0_20 = arith.constant 0 : index
    %c0_21 = arith.constant 0 : index
    %21 = vector.load %arg9[%c0_20, %c0_21] : memref<1x128xf32, #tpu.memory_space<vmem>>, vector<1x128xf32>
    %22 = vector.broadcast %21 : vector<1x128xf32> to vector<16x128xf32>
    %23 = arith.addf %20, %22 : vector<16x128xf32>
    %cst_22 = arith.constant 0.000000e+00 : f32
    %24 = vector.broadcast %cst_22 : f32 to vector<16x128xf32>
    %25 = arith.maximumf %23, %24 : vector<16x128xf32>
    %c0_23 = arith.constant 0 : index
    %c0_24 = arith.constant 0 : index
    %26 = vector.load %arg10[%c0_23, %c0_24] : memref<128x128xf32, #tpu.memory_space<vmem>>, vector<128x128xf32>
    %cst_25 = arith.constant dense<0.000000e+00> : vector<16x128xf32>
    %27 = tpu.matmul %25, %26, %cst_25 {dimension_numbers = #tpu.dot_dimension_numbers<[1], [0], [0], [1], [0, 0, 1, 1], [], []>} : vector<16x128xf32>, vector<128x128xf32>, vector<16x128xf32> -> vector<16x128xf32>
    %c0_26 = arith.constant 0 : index
    %c0_27 = arith.constant 0 : index
    %28 = vector.load %arg11[%c0_26, %c0_27] : memref<1x128xf32, #tpu.memory_space<vmem>>, vector<1x128xf32>
    %29 = vector.broadcast %28 : vector<1x128xf32> to vector<16x128xf32>
    %30 = arith.addf %27, %29 : vector<16x128xf32>
    %31 = arith.negf %30 : vector<16x128xf32>
    %32 = math.exp %31 : vector<16x128xf32>
    %cst_28 = arith.constant 1.000000e+00 : f32
    %33 = vector.broadcast %cst_28 : f32 to vector<16x128xf32>
    %34 = arith.addf %33, %32 : vector<16x128xf32>
    %35 = arith.divf %33, %34 : vector<16x128xf32>
    %c0_29 = arith.constant 0 : index
    %c0_30 = arith.constant 0 : index
    %36 = vector.load %arg12[%c0_29, %c0_30] : memref<16x128xf32, #tpu.memory_space<vmem>>, vector<16x128xf32>
    tpu.vector_store %arg12[%c0_29, %c0_30], %35 {strides = array<i32>} : memref<16x128xf32, #tpu.memory_space<vmem>>, vector<16x128xf32>,
    return
  }
  func.func @transform_0(%arg0: i32) -> (i32, i32) {
    %c0_i32 = arith.constant 0 : i32
    %c0_i32_0 = arith.constant 0 : i32
    return %arg0, %c0_i32 : i32, i32
  }
  func.func @transform_1(%arg0: i32) -> (i32, i32) {
    %c0_i32 = arith.constant 0 : i32
    %c0_i32_0 = arith.constant 0 : i32
    return %arg0, %c0_i32 : i32, i32
  }
  func.func @transform_2(%arg0: i32) -> (i32, i32) {
    %c0_i32 = arith.constant 0 : i32
    %c0_i32_0 = arith.constant 0 : i32
    %c0_i32_1 = arith.constant 0 : i32
    return %c0_i32, %c0_i32_0 : i32, i32
  }
  func.func @transform_3(%arg0: i32) -> (i32, i32) {
    %c0_i32 = arith.constant 0 : i32
    %c0_i32_0 = arith.constant 0 : i32
    %c0_i32_1 = arith.constant 0 : i32
    return %c0_i32, %c0_i32_0 : i32, i32
  }
  func.func @transform_4(%arg0: i32) -> (i32, i32) {
    %c0_i32 = arith.constant 0 : i32
    %c0_i32_0 = arith.constant 0 : i32
    %c0_i32_1 = arith.constant 0 : i32
    return %c0_i32, %c0_i32_0 : i32, i32
  }
  func.func @transform_5(%arg0: i32) -> (i32, i32) {
    %c0_i32 = arith.constant 0 : i32
    %c0_i32_0 = arith.constant 0 : i32
    %c0_i32_1 = arith.constant 0 : i32
    return %c0_i32, %c0_i32_0 : i32, i32
  }
  func.func @transform_6(%arg0: i32) -> (i32, i32) {
    %c0_i32 = arith.constant 0 : i32
    %c0_i32_0 = arith.constant 0 : i32
    %c0_i32_1 = arith.constant 0 : i32
    return %c0_i32, %c0_i32_0 : i32, i32
  }
  func.func @transform_7(%arg0: i32) -> (i32, i32) {
    %c0_i32 = arith.constant 0 : i32
    %c0_i32_0 = arith.constant 0 : i32
    %c0_i32_1 = arith.constant 0 : i32
    return %c0_i32, %c0_i32_0 : i32, i32
  }
  func.func @transform_8(%arg0: i32) -> (i32, i32) {
    %c0_i32 = arith.constant 0 : i32
    %c0_i32_0 = arith.constant 0 : i32
    %c0_i32_1 = arith.constant 0 : i32
    return %c0_i32, %c0_i32_0 : i32, i32
  }
  func.func @transform_9(%arg0: i32) -> (i32, i32) {
    %c0_i32 = arith.constant 0 : i32
    %c0_i32_0 = arith.constant 0 : i32
    %c0_i32_1 = arith.constant 0 : i32
    return %c0_i32, %c0_i32_0 : i32, i32
  }
  func.func @transform_10(%arg0: i32) -> (i32, i32) {
    %c0_i32 = arith.constant 0 : i32
    %c0_i32_0 = arith.constant 0 : i32
    %c0_i32_1 = arith.constant 0 : i32
    return %c0_i32, %c0_i32_0 : i32, i32
  }
  func.func @transform_11(%arg0: i32) -> (i32, i32) {
    %c0_i32 = arith.constant 0 : i32
    %c0_i32_0 = arith.constant 0 : i32
    return %arg0, %c0_i32 : i32, i32
  }
}

</mosaic_0001>

<llo_original>
// kernel: mlp_2_input_forward.1
$region0: #{mlp_2_input_forward.1}
  #allocation0 [shape = 'u32[]', space=smem, size = 0x4, offset = 0x4, fixed_abs, tag = 'smem constant byte address 0x4 - core index']
  #allocation1 [shape = 'u32[72,128]{1,0:T(1,128)}', space=vmem, size = 0x9000, scoped, tag = 'internal scratch']
  %s0 = inlined_call_operand.hbm [shape: f32[8,16], index: 0, kind: input, shape index: {}]
  %s1 = inlined_call_operand.hbm [shape: f32[8,32], index: 1, kind: input, shape index: {}]
  %s2 = inlined_call_operand.hbm [shape: f32[16,256], index: 2, kind: input, shape index: {}]
  %s3 = inlined_call_operand.hbm [shape: f32[32,256], index: 3, kind: input, shape index: {}]
  %s4 = inlined_call_operand.hbm [shape: f32[1,256], index: 4, kind: input, shape index: {}]
  %s5 = inlined_call_operand.hbm [shape: f32[256,128], index: 5, kind: input, shape index: {}]
  %s6 = inlined_call_operand.vmem [shape: f32[1,128], index: 6, kind: input, shape index: {}]
  %s7 = inlined_call_operand.hbm [shape: f32[128,128], index: 7, kind: input, shape index: {}]
  %s8 = inlined_call_operand.vmem [shape: f32[1,128], index: 8, kind: input, shape index: {}]
  %s9 = inlined_call_operand.hbm [shape: f32[128,128], index: 9, kind: input, shape index: {}]
  %s10 = inlined_call_operand.vmem [shape: f32[1,128], index: 10, kind: input, shape index: {}]
  %s11 = inlined_call_operand.hbm [shape: f32[8,128], index: 11, kind: output, shape index: {}]
  %s12 = sld [smem:[#allocation0]]
  $region86: #{mlp_2_input_forward.1} parent=0
    _
  %s14 = ssub.s32 1, %s12
  %s15 = scalar_select 0, %s14, %s12
  $region1: #{mlp_2_input_forward.1} parent=0
    #allocation2 [shape = 'u8[8192]{0}', space=vmem, size = 0x2000, scoped, tag = 'input window, operand 0, single buffered']
    #allocation3 [shape = 's32[1]{0}', space=sflag, size = 0x4, scoped, tag = 'scoped memory for mlp_2_input_forward.1']
    #allocation4 [shape = 's32[1]{0}', space=sflag, size = 0x4, scoped, tag = 'scoped memory for mlp_2_input_forward.1']
    #allocation5 [shape = 'u8[8192]{0}', space=vmem, size = 0x2000, scoped, tag = 'input window, operand 1, single buffered']
    #allocation6 [shape = 's32[1]{0}', space=sflag, size = 0x4, scoped, tag = 'scoped memory for mlp_2_input_forward.1']
    #allocation7 [shape = 'u8[16384]{0}', space=vmem, size = 0x4000, scoped, tag = 'input window, operand 2, single buffered']
    #allocation8 [shape = 'u8[32768]{0}', space=vmem, size = 0x8000, scoped, tag = 'input window, operand 3, single buffered']
    #allocation9 [shape = 's32[1]{0}', space=sflag, size = 0x4, scoped, tag = 'scoped memory for mlp_2_input_forward.1']
    #allocation10 [shape = 'u8[1024]{0}', space=vmem, size = 0x400, scoped, tag = 'input window, operand 4, single buffered']
    #allocation11 [shape = 'u8[131072]{0}', space=vmem, size = 0x20000, scoped, tag = 'input window, operand 5, single buffered']
    #allocation12 [shape = 's32[1]{0}', space=sflag, size = 0x4, scoped, tag = 'scoped memory for mlp_2_input_forward.1']
    #allocation13 [shape = 'u8[65536]{0}', space=vmem, size = 0x10000, scoped, tag = 'input window, operand 7, single buffered']
    #allocation14 [shape = 'u8[65536]{0}', space=vmem, size = 0x10000, scoped, tag = 'input window, operand 9, single buffered']
    #allocation15 [shape = 's32[1]{0}', space=sflag, size = 0x4, scoped, tag = 'scoped memory for mlp_2_input_forward.1']
    #allocation16 [shape = 'u8[8192]{0}', space=vmem, size = 0x2000, scoped, tag = 'output window, operand 0, single buffered']
    %16 = vsyncpa [#allocation3], 0
    %17 = vsyncpa [#allocation6], 0
    %18 = vsyncpa [#allocation9], 0
    %19 = vsyncpa [#allocation12], 0
    %20 = vsyncpa [#allocation15], 0
    %21 = vsyncpa [#allocation4], 0
    // Predicated region
    $region2: #{mlp_2_input_forward.1} parent=1 // pred_check
      _
    $region3: #{mlp_2_input_forward.1} parent=1 // pred_check_branch
      %23 = sbr.rel (0) target = $region5
    $region4: #{mlp_2_input_forward.1} parent=1 // pred_region
      %25 = vsyncadd [#allocation3], 128
      %s26 = sshll.u32 %s0, 4
      %s27 = int_to_ptr.hbm [resolvable:$true] %s26
      %s28 = sshll.u32 [#allocation2], 4
      %s29 = int_to_ptr.vmem [resolvable:$true] %s28
      %34 = dma.hbm_to_vmem [thread:$0]  %s27, 128, %s29, [#allocation3], 128, 128, 8
    $region5: #{mlp_2_input_forward.1} parent=1 // pred_fallthru
      _
    // Predicated region
    $region6: #{mlp_2_input_forward.1} parent=1 // pred_check
      _
    $region7: #{mlp_2_input_forward.1} parent=1 // pred_check_branch
      %36 = sbr.rel (0) target = $region9
    $region8: #{mlp_2_input_forward.1} parent=1 // pred_region
      %38 = vsyncadd [#allocation6], 128
      %s39 = sshll.u32 %s1, 4
      %s40 = int_to_ptr.hbm [resolvable:$true] %s39
      %s41 = sshll.u32 [#allocation5], 4
      %s42 = int_to_ptr.vmem [resolvable:$true] %s41
      %47 = dma.hbm_to_vmem [thread:$0]  %s40, 128, %s42, [#allocation6], 128, 128, 8
    $region9: #{mlp_2_input_forward.1} parent=1 // pred_fallthru
      _
    // Predicated region
    $region10: #{mlp_2_input_forward.1} parent=1 // pred_check
      _
    $region11: #{mlp_2_input_forward.1} parent=1 // pred_check_branch
      %49 = sbr.rel (0) target = $region13
    $region12: #{mlp_2_input_forward.1} parent=1 // pred_region
      %51 = vsyncadd [#allocation6], 0
      %s52 = sshll.u32 %s2, 4
      %s53 = int_to_ptr.hbm [resolvable:$true] %s52
      %s54 = sshll.u32 [#allocation7], 4
      %s55 = int_to_ptr.vmem [resolvable:$true] %s54
      %60 = dma.hbm_to_vmem [thread:$0]  %s53, 512, %s55, [#allocation6], 256, 256, 16
    $region13: #{mlp_2_input_forward.1} parent=1 // pred_fallthru
      _
    // Predicated region
    $region14: #{mlp_2_input_forward.1} parent=1 // pred_check
      _
    $region15: #{mlp_2_input_forward.1} parent=1 // pred_check_branch
      %62 = sbr.rel (0) target = $region17
    $region16: #{mlp_2_input_forward.1} parent=1 // pred_region
      %64 = vsyncadd [#allocation9], 0
      %s65 = sshll.u32 %s3, 4
      %s66 = int_to_ptr.hbm [resolvable:$true] %s65
      %s67 = sshll.u32 [#allocation8], 4
      %s68 = int_to_ptr.vmem [resolvable:$true] %s67
      %73 = dma.hbm_to_vmem [thread:$0]  %s66, 1024, %s68, [#allocation9], 256, 256, 16
    $region17: #{mlp_2_input_forward.1} parent=1 // pred_fallthru
      _
    // Predicated region
    $region18: #{mlp_2_input_forward.1} parent=1 // pred_check
      _
    $region19: #{mlp_2_input_forward.1} parent=1 // pred_check_branch
      %75 = sbr.rel (0) target = $region21
    $region20: #{mlp_2_input_forward.1} parent=1 // pred_region
      %77 = vsyncadd [#allocation9], 0
      %s79 = sshll.u32 %s4, 4
      %s80 = int_to_ptr.hbm [resolvable:$true] %s79
      %s81 = sshll.u32 [#allocation10], 4
      %s82 = int_to_ptr.vmem [resolvable:$true] %s81
      %84 = dma.hbm_to_vmem [thread:$0]  %s80, 32, %s82, [#allocation9]
    $region21: #{mlp_2_input_forward.1} parent=1 // pred_fallthru
      _
    // Predicated region
    $region22: #{mlp_2_input_forward.1} parent=1 // pred_check
      _
    $region23: #{mlp_2_input_forward.1} parent=1 // pred_check_branch
      %86 = sbr.rel (0) target = $region25
    $region24: #{mlp_2_input_forward.1} parent=1 // pred_region
      %88 = vsyncadd [#allocation12], 0
      %s89 = sshll.u32 %s5, 4
      %s90 = int_to_ptr.hbm [resolvable:$true] %s89
      %s91 = sshll.u32 [#allocation11], 4
      %s92 = int_to_ptr.vmem [resolvable:$true] %s91
      %97 = dma.hbm_to_vmem [thread:$0]  %s90, 4096, %s92, [#allocation12], 128, 128, 8
    $region25: #{mlp_2_input_forward.1} parent=1 // pred_fallthru
      _
    // Predicated region
    $region26: #{mlp_2_input_forward.1} parent=1 // pred_check
      _
    $region27: #{mlp_2_input_forward.1} parent=1 // pred_check_branch
      %99 = sbr.rel (0) target = $region29
    $region28: #{mlp_2_input_forward.1} parent=1 // pred_region
      _
    $region29: #{mlp_2_input_forward.1} parent=1 // pred_fallthru
      _
    // Predicated region
    $region30: #{mlp_2_input_forward.1} parent=1 // pred_check
      _
    $region31: #{mlp_2_input_forward.1} parent=1 // pred_check_branch
      %101 = sbr.rel (0) target = $region33
    $region32: #{mlp_2_input_forward.1} parent=1 // pred_region
      %103 = vsyncadd [#allocation12], 0
      %s104 = sshll.u32 %s7, 4
      %s105 = int_to_ptr.hbm [resolvable:$true] %s104
      %s106 = sshll.u32 [#allocation13], 4
      %s107 = int_to_ptr.vmem [resolvable:$true] %s106
      %112 = dma.hbm_to_vmem [thread:$0]  %s105, 2048, %s107, [#allocation12], 128, 128, 8
    $region33: #{mlp_2_input_forward.1} parent=1 // pred_fallthru
      _
    // Predicated region
    $region34: #{mlp_2_input_forward.1} parent=1 // pred_check
      _
    $region35: #{mlp_2_input_forward.1} parent=1 // pred_check_branch
      %114 = sbr.rel (0) target = $region37
    $region36: #{mlp_2_input_forward.1} parent=1 // pred_region
      _
    $region37: #{mlp_2_input_forward.1} parent=1 // pred_fallthru
      _
    // Predicated region
    $region38: #{mlp_2_input_forward.1} parent=1 // pred_check
      _
    $region39: #{mlp_2_input_forward.1} parent=1 // pred_check_branch
      %116 = sbr.rel (0) target = $region41
    $region40: #{mlp_2_input_forward.1} parent=1 // pred_region
      %118 = vsyncadd [#allocation15], 0
      %s119 = sshll.u32 %s9, 4
      %s120 = int_to_ptr.hbm [resolvable:$true] %s119
      %s121 = sshll.u32 [#allocation14], 4
      %s122 = int_to_ptr.vmem [resolvable:$true] %s121
      %127 = dma.hbm_to_vmem [thread:$0]  %s120, 2048, %s122, [#allocation15], 128, 128, 8
    $region41: #{mlp_2_input_forward.1} parent=1 // pred_fallthru
      _
    // Predicated region
    $region42: #{mlp_2_input_forward.1} parent=1 // pred_check
      _
    $region43: #{mlp_2_input_forward.1} parent=1 // pred_check_branch
      %129 = sbr.rel (0) target = $region45
    $region44: #{mlp_2_input_forward.1} parent=1 // pred_region
      _
    $region45: #{mlp_2_input_forward.1} parent=1 // pred_fallthru
      _
    // Predicated region
    $region46: #{mlp_2_input_forward.1} parent=1 // pred_check
      _
    $region47: #{mlp_2_input_forward.1} parent=1 // pred_check_branch
      %131 = sbr.rel (0) target = $region49
    $region48: #{mlp_2_input_forward.1} parent=1 // pred_region
      %133 = dma.done [#allocation3], 256
    $region49: #{mlp_2_input_forward.1} parent=1 // pred_fallthru
      _
    // Predicated region
    $region50: #{mlp_2_input_forward.1} parent=1 // pred_check
      _
    $region51: #{mlp_2_input_forward.1} parent=1 // pred_check_branch
      %135 = sbr.rel (0) target = $region53
    $region52: #{mlp_2_input_forward.1} parent=1 // pred_region
      %137 = dma.done [#allocation6], 256
    $region53: #{mlp_2_input_forward.1} parent=1 // pred_fallthru
      _
    // Predicated region
    $region54: #{mlp_2_input_forward.1} parent=1 // pred_check
      _
    $region55: #{mlp_2_input_forward.1} parent=1 // pred_check_branch
      %139 = sbr.rel (0) target = $region57
    $region56: #{mlp_2_input_forward.1} parent=1 // pred_region
      %141 = dma.done [#allocation6], 512
    $region57: #{mlp_2_input_forward.1} parent=1 // pred_fallthru
      _
    // Predicated region
    $region58: #{mlp_2_input_forward.1} parent=1 // pred_check
      _
    $region59: #{mlp_2_input_forward.1} parent=1 // pred_check_branch
      %143 = sbr.rel (0) target = $region61
    $region60: #{mlp_2_input_forward.1} parent=1 // pred_region
      %145 = dma.done [#allocation9], 1024
    $region61: #{mlp_2_input_forward.1} parent=1 // pred_fallthru
      _
    // Predicated region
    $region62: #{mlp_2_input_forward.1} parent=1 // pred_check
      _
    $region63: #{mlp_2_input_forward.1} parent=1 // pred_check_branch
      %147 = sbr.rel (0) target = $region65
    $region64: #{mlp_2_input_forward.1} parent=1 // pred_region
      %149 = dma.done [#allocation9], 32
    $region65: #{mlp_2_input_forward.1} parent=1 // pred_fallthru
      _
    // Predicated region
    $region66: #{mlp_2_input_forward.1} parent=1 // pred_check
      _
    $region67: #{mlp_2_input_forward.1} parent=1 // pred_check_branch
      %151 = sbr.rel (0) target = $region69
    $region68: #{mlp_2_input_forward.1} parent=1 // pred_region
      %153 = dma.done [#allocation12], 4096
    $region69: #{mlp_2_input_forward.1} parent=1 // pred_fallthru
      _
    // Predicated region
    $region70: #{mlp_2_input_forward.1} parent=1 // pred_check
      _
    $region71: #{mlp_2_input_forward.1} parent=1 // pred_check_branch
      %155 = sbr.rel (0) target = $region73
    $region72: #{mlp_2_input_forward.1} parent=1 // pred_region
      %157 = dma.done [#allocation12], 2048
    $region73: #{mlp_2_input_forward.1} parent=1 // pred_fallthru
      _
    // Predicated region
    $region74: #{mlp_2_input_forward.1} parent=1 // pred_check
      _
    $region75: #{mlp_2_input_forward.1} parent=1 // pred_check_branch
      %159 = sbr.rel (0) target = $region77
    $region76: #{mlp_2_input_forward.1} parent=1 // pred_region
      %161 = dma.done [#allocation15], 2048
    $region77: #{mlp_2_input_forward.1} parent=1 // pred_fallthru
      _
    %v162 = vld [vmem:[#allocation2] sm:$0xff]
    %v163 = vld [vmem:[#allocation2 + $0x8] sm:$0xff]
    %v164 = vld [vmem:[#allocation5] sm:$0xff]
    %v165 = vld [vmem:[#allocation5 + $0x8] sm:$0xff]
    %v166 = vld [vmem:[#allocation7] sm:$0xff]
    %v167 = vld [vmem:[#allocation7 + $0x8] sm:$0xff]
    %v168 = vld [vmem:[#allocation7 + $0x10] sm:$0xff]
    %v169 = vld [vmem:[#allocation7 + $0x18] sm:$0xff]
    %v170 = vld [vmem:[#allocation8] sm:$0xff]
    %v171 = vld [vmem:[#allocation8 + $0x8] sm:$0xff]
    %v172 = vld [vmem:[#allocation8 + $0x10] sm:$0xff]
    %v173 = vld [vmem:[#allocation8 + $0x18] sm:$0xff]
    %v174 = vld [vmem:[#allocation8 + $0x20] sm:$0xff]
    %v175 = vld [vmem:[#allocation8 + $0x28] sm:$0xff]
    %v176 = vld [vmem:[#allocation8 + $0x30] sm:$0xff]
    %v177 = vld [vmem:[#allocation8 + $0x38] sm:$0xff]
    %vm178 = vcmask 261120
    %v180 = vsel %vm178, %v164, 0
    %v183 = vsel %vm178, %v165, 0
    %185 = vmatpush.msra.mxu0 0.0
    %186 = vmatpush.msra.mxu0 0.0
    %187 = vmatpush.msra.mxu0 0.0
    %188 = vmatpush.msra.mxu0 0.0
    %189 = vmatpush.msra.mxu0 0.0
    %190 = vmatpush.msra.mxu0 0.0
    %191 = vmatpush.msra.mxu0 0.0
    %192 = vmatpush.msra.mxu0 0.0
    %193 = vmatpush.msra.mxu0 0.0
    %194 = vmatpush.msra.mxu0 0.0
    %195 = vmatpush.msra.mxu0 0.0
    %196 = vmatpush.msra.mxu0 0.0
    %197 = vmatpush.msra.mxu0 %v176
    %198 = vmatpush.msra.mxu0 %v174
    %199 = vmatpush.msra.mxu0 %v172
    %200 = vmatpush.msra.mxu0 %v170
    %201 = vmatmul.f32.gmra.mxu0 %v180
    %v202 = vpop.f32.mrf.mxu0
    %v203 = vadd.f32 0.0, %v202
    %204 = vmatmul.f32.gmra.mxu0 %v183
    %v205 = vpop.f32.mrf.mxu0
    %v206 = vadd.f32 0.0, %v205
    %207 = vdwg.mxu0
    %208 = vmatpush.msra.mxu0 0.0
    %209 = vmatpush.msra.mxu0 0.0
    %210 = vmatpush.msra.mxu0 0.0
    %211 = vmatpush.msra.mxu0 0.0
    %212 = vmatpush.msra.mxu0 0.0
    %213 = vmatpush.msra.mxu0 0.0
    %214 = vmatpush.msra.mxu0 0.0
    %215 = vmatpush.msra.mxu0 0.0
    %216 = vmatpush.msra.mxu0 0.0
    %217 = vmatpush.msra.mxu0 0.0
    %218 = vmatpush.msra.mxu0 0.0
    %219 = vmatpush.msra.mxu0 0.0
    %220 = vmatpush.msra.mxu0 %v177
    %221 = vmatpush.msra.mxu0 %v175
    %222 = vmatpush.msra.mxu0 %v173
    %223 = vmatpush.msra.mxu0 %v171
    %224 = vmatmul.f32.gmra.mxu0 %v180
    %v225 = vpop.f32.mrf.mxu0
    %v226 = vadd.f32 0.0, %v225
    %227 = vmatmul.f32.gmra.mxu0 %v183
    %v228 = vpop.f32.mrf.mxu0
    %v229 = vadd.f32 0.0, %v228
    %230 = vdwg.mxu0
    %vm231 = vcmask 130048
    %v233 = vsel %vm231, %v162, 0
    %v236 = vsel %vm231, %v163, 0
    %238 = vmatpush.msra.mxu0 0.0
    %239 = vmatpush.msra.mxu0 0.0
    %240 = vmatpush.msra.mxu0 0.0
    %241 = vmatpush.msra.mxu0 0.0
    %242 = vmatpush.msra.mxu0 0.0
    %243 = vmatpush.msra.mxu0 0.0
    %244 = vmatpush.msra.mxu0 0.0
    %245 = vmatpush.msra.mxu0 0.0
    %246 = vmatpush.msra.mxu0 0.0
    %247 = vmatpush.msra.mxu0 0.0
    %248 = vmatpush.msra.mxu0 0.0
    %249 = vmatpush.msra.mxu0 0.0
    %250 = vmatpush.msra.mxu0 0.0
    %251 = vmatpush.msra.mxu0 0.0
    %252 = vmatpush.msra.mxu0 %v168
    %253 = vmatpush.msra.mxu0 %v166
    %254 = vmatmul.f32.gmra.mxu0 %v233
    %v255 = vpop.f32.mrf.mxu0
    %v256 = vadd.f32 %v203, %v255
    %257 = vmatmul.f32.gmra.mxu0 %v236
    %v258 = vpop.f32.mrf.mxu0
    %v259 = vadd.f32 %v206, %v258
    %260 = vdwg.mxu0
    %261 = vmatpush.msra.mxu0 0.0
    %262 = vmatpush.msra.mxu0 0.0
    %263 = vmatpush.msra.mxu0 0.0
    %264 = vmatpush.msra.mxu0 0.0
    %265 = vmatpush.msra.mxu0 0.0
    %266 = vmatpush.msra.mxu0 0.0
    %267 = vmatpush.msra.mxu0 0.0
    %268 = vmatpush.msra.mxu0 0.0
    %269 = vmatpush.msra.mxu0 0.0
    %270 = vmatpush.msra.mxu0 0.0
    %271 = vmatpush.msra.mxu0 0.0
    %272 = vmatpush.msra.mxu0 0.0
    %273 = vmatpush.msra.mxu0 0.0
    %274 = vmatpush.msra.mxu0 0.0
    %275 = vmatpush.msra.mxu0 %v169
    %276 = vmatpush.msra.mxu0 %v167
    %277 = vmatmul.f32.gmra.mxu0 %v233
    %v278 = vpop.f32.mrf.mxu0
    %v279 = vadd.f32 %v226, %v278
    %280 = vmatmul.f32.gmra.mxu0 %v236
    %v281 = vpop.f32.mrf.mxu0
    %v282 = vadd.f32 %v229, %v281
    %283 = vdwg.mxu0
    %v284 = vld [vmem:[#allocation10] sm:$0x3]
    %v286 = vperm.slane %v284, 0
    %v287 = vperm.slane %v284, 1
    %v290 = vadd.f32 %v256, %v286
    %v291 = vadd.f32 %v279, %v287
    %v292 = vadd.f32 %v259, %v286
    %v293 = vadd.f32 %v282, %v287
    %v294 = vmax.f32 %v290, 0.0
    %v295 = vmax.f32 %v291, 0.0
    %v296 = vmax.f32 %v292, 0.0
    %v297 = vmax.f32 %v293, 0.0
    %v298 = vld [vmem:[#allocation11] sm:$0xff]
    %v299 = vld [vmem:[#allocation11 + $0x8] sm:$0xff]
    %v300 = vld [vmem:[#allocation11 + $0x10] sm:$0xff]
    %v301 = vld [vmem:[#allocation11 + $0x18] sm:$0xff]
    %v302 = vld [vmem:[#allocation11 + $0x20] sm:$0xff]
    %v303 = vld [vmem:[#allocation11 + $0x28] sm:$0xff]
    %v304 = vld [vmem:[#allocation11 + $0x30] sm:$0xff]
    %v305 = vld [vmem:[#allocation11 + $0x38] sm:$0xff]
    %v306 = vld [vmem:[#allocation11 + $0x40] sm:$0xff]
    %v307 = vld [vmem:[#allocation11 + $0x48] sm:$0xff]
    %v308 = vld [vmem:[#allocation11 + $0x50] sm:$0xff]
    %v309 = vld [vmem:[#allocation11 + $0x58] sm:$0xff]
    %v310 = vld [vmem:[#allocation11 + $0x60] sm:$0xff]
    %v311 = vld [vmem:[#allocation11 + $0x68] sm:$0xff]
    %v312 = vld [vmem:[#allocation11 + $0x70] sm:$0xff]
    %v313 = vld [vmem:[#allocation11 + $0x78] sm:$0xff]
    %v314 = vld [vmem:[#allocation11 + $0x80] sm:$0xff]
    %v315 = vld [vmem:[#allocation11 + $0x88] sm:$0xff]
    %v316 = vld [vmem:[#allocation11 + $0x90] sm:$0xff]
    %v317 = vld [vmem:[#allocation11 + $0x98] sm:$0xff]
    %v318 = vld [vmem:[#allocation11 + $0xa0] sm:$0xff]
    %v319 = vld [vmem:[#allocation11 + $0xa8] sm:$0xff]
    %v320 = vld [vmem:[#allocation11 + $0xb0] sm:$0xff]
    %v321 = vld [vmem:[#allocation11 + $0xb8] sm:$0xff]
    %v322 = vld [vmem:[#allocation11 + $0xc0] sm:$0xff]
    %v323 = vld [vmem:[#allocation11 + $0xc8] sm:$0xff]
    %v324 = vld [vmem:[#allocation11 + $0xd0] sm:$0xff]
    %v325 = vld [vmem:[#allocation11 + $0xd8] sm:$0xff]
    %v326 = vld [vmem:[#allocation11 + $0xe0] sm:$0xff]
    %v327 = vld [vmem:[#allocation11 + $0xe8] sm:$0xff]
    %v328 = vld [vmem:[#allocation11 + $0xf0] sm:$0xff]
    %v329 = vld [vmem:[#allocation11 + $0xf8] sm:$0xff]
    %v330 = vld [vmem:[%s6] sm:$0x1]
    %v332 = vperm.slane %v330, 0
    %334 = vmatpush.msra.mxu0 %v313
    %335 = vmatpush.msra.mxu0 %v312
    %336 = vmatpush.msra.mxu0 %v311
    %337 = vmatpush.msra.mxu0 %v310
    %338 = vmatpush.msra.mxu0 %v309
    %339 = vmatpush.msra.mxu0 %v308
    %340 = vmatpush.msra.mxu0 %v307
    %341 = vmatpush.msra.mxu0 %v306
    %342 = vmatpush.msra.mxu0 %v305
    %343 = vmatpush.msra.mxu0 %v304
    %344 = vmatpush.msra.mxu0 %v303
    %345 = vmatpush.msra.mxu0 %v302
    %346 = vmatpush.msra.mxu0 %v301
    %347 = vmatpush.msra.mxu0 %v300
    %348 = vmatpush.msra.mxu0 %v299
    %349 = vmatpush.msra.mxu0 %v298
    %350 = vmatmul.f32.gmra.mxu0 %v294
    %v351 = vpop.f32.mrf.mxu0
    %v352 = vadd.f32 %v332, %v351
    %353 = vmatmul.f32.gmra.mxu0 %v296
    %v354 = vpop.f32.mrf.mxu0
    %v355 = vadd.f32 %v332, %v354
    %356 = vdwg.mxu0
    %357 = vmatpush.msra.mxu0 %v329
    %358 = vmatpush.msra.mxu0 %v328
    %359 = vmatpush.msra.mxu0 %v327
    %360 = vmatpush.msra.mxu0 %v326
    %361 = vmatpush.msra.mxu0 %v325
    %362 = vmatpush.msra.mxu0 %v324
    %363 = vmatpush.msra.mxu0 %v323
    %364 = vmatpush.msra.mxu0 %v322
    %365 = vmatpush.msra.mxu0 %v321
    %366 = vmatpush.msra.mxu0 %v320
    %367 = vmatpush.msra.mxu0 %v319
    %368 = vmatpush.msra.mxu0 %v318
    %369 = vmatpush.msra.mxu0 %v317
    %370 = vmatpush.msra.mxu0 %v316
    %371 = vmatpush.msra.mxu0 %v315
    %372 = vmatpush.msra.mxu0 %v314
    %373 = vmatmul.f32.gmra.mxu0 %v295
    %v374 = vpop.f32.mrf.mxu0
    %v375 = vadd.f32 %v352, %v374
    %376 = vmatmul.f32.gmra.mxu0 %v297
    %v377 = vpop.f32.mrf.mxu0
    %v378 = vadd.f32 %v355, %v377
    %379 = vdwg.mxu0
    %v380 = vmax.f32 %v375, 0.0
    %v381 = vmax.f32 %v378, 0.0
    %v382 = vld [vmem:[#allocation13] sm:$0xff]
    %v383 = vld [vmem:[#allocation13 + $0x8] sm:$0xff]
    %v384 = vld [vmem:[#allocation13 + $0x10] sm:$0xff]
    %v385 = vld [vmem:[#allocation13 + $0x18] sm:$0xff]
    %v386 = vld [vmem:[#allocation13 + $0x20] sm:$0xff]
    %v387 = vld [vmem:[#allocation13 + $0x28] sm:$0xff]
    %v388 = vld [vmem:[#allocation13 + $0x30] sm:$0xff]
    %v389 = vld [vmem:[#allocation13 + $0x38] sm:$0xff]
    %v390 = vld [vmem:[#allocation13 + $0x40] sm:$0xff]
    %v391 = vld [vmem:[#allocation13 + $0x48] sm:$0xff]
    %v392 = vld [vmem:[#allocation13 + $0x50] sm:$0xff]
    %v393 = vld [vmem:[#allocation13 + $0x58] sm:$0xff]
    %v394 = vld [vmem:[#allocation13 + $0x60] sm:$0xff]
    %v395 = vld [vmem:[#allocation13 + $0x68] sm:$0xff]
    %v396 = vld [vmem:[#allocation13 + $0x70] sm:$0xff]
    %v397 = vld [vmem:[#allocation13 + $0x78] sm:$0xff]
    %v398 = vld [vmem:[%s8] sm:$0x1]
    %v400 = vperm.slane %v398, 0
    %402 = vmatpush.msra.mxu0 %v397
    %403 = vmatpush.msra.mxu0 %v396
    %404 = vmatpush.msra.mxu0 %v395
    %405 = vmatpush.msra.mxu0 %v394
    %406 = vmatpush.msra.mxu0 %v393
    %407 = vmatpush.msra.mxu0 %v392
    %408 = vmatpush.msra.mxu0 %v391
    %409 = vmatpush.msra.mxu0 %v390
    %410 = vmatpush.msra.mxu0 %v389
    %411 = vmatpush.msra.mxu0 %v388
    %412 = vmatpush.msra.mxu0 %v387
    %413 = vmatpush.msra.mxu0 %v386
    %414 = vmatpush.msra.mxu0 %v385
    %415 = vmatpush.msra.mxu0 %v384
    %416 = vmatpush.msra.mxu0 %v383
    %417 = vmatpush.msra.mxu0 %v382
    %418 = vmatmul.f32.gmra.mxu0 %v380
    %v419 = vpop.f32.mrf.mxu0
    %v420 = vadd.f32 %v400, %v419
    %421 = vmatmul.f32.gmra.mxu0 %v381
    %v422 = vpop.f32.mrf.mxu0
    %v423 = vadd.f32 %v400, %v422
    %424 = vdwg.mxu0
    %v425 = vmax.f32 %v420, 0.0
    %v426 = vmax.f32 %v423, 0.0
    %v427 = vld [vmem:[#allocation14] sm:$0xff]
    %v428 = vld [vmem:[#allocation14 + $0x8] sm:$0xff]
    %v429 = vld [vmem:[#allocation14 + $0x10] sm:$0xff]
    %v430 = vld [vmem:[#allocation14 + $0x18] sm:$0xff]
    %v431 = vld [vmem:[#allocation14 + $0x20] sm:$0xff]
    %v432 = vld [vmem:[#allocation14 + $0x28] sm:$0xff]
    %v433 = vld [vmem:[#allocation14 + $0x30] sm:$0xff]
    %v434 = vld [vmem:[#allocation14 + $0x38] sm:$0xff]
    %v435 = vld [vmem:[#allocation14 + $0x40] sm:$0xff]
    %v436 = vld [vmem:[#allocation14 + $0x48] sm:$0xff]
    %v437 = vld [vmem:[#allocation14 + $0x50] sm:$0xff]
    %v438 = vld [vmem:[#allocation14 + $0x58] sm:$0xff]
    %v439 = vld [vmem:[#allocation14 + $0x60] sm:$0xff]
    %v440 = vld [vmem:[#allocation14 + $0x68] sm:$0xff]
    %v441 = vld [vmem:[#allocation14 + $0x70] sm:$0xff]
    %v442 = vld [vmem:[#allocation14 + $0x78] sm:$0xff]
    %v443 = vld [vmem:[%s10] sm:$0x1]
    %v445 = vperm.slane %v443, 0
    %447 = vmatpush.msra.mxu0 %v442
    %448 = vmatpush.msra.mxu0 %v441
    %449 = vmatpush.msra.mxu0 %v440
    %450 = vmatpush.msra.mxu0 %v439
    %451 = vmatpush.msra.mxu0 %v438
    %452 = vmatpush.msra.mxu0 %v437
    %453 = vmatpush.msra.mxu0 %v436
    %454 = vmatpush.msra.mxu0 %v435
    %455 = vmatpush.msra.mxu0 %v434
    %456 = vmatpush.msra.mxu0 %v433
    %457 = vmatpush.msra.mxu0 %v432
    %458 = vmatpush.msra.mxu0 %v431
    %459 = vmatpush.msra.mxu0 %v430
    %460 = vmatpush.msra.mxu0 %v429
    %461 = vmatpush.msra.mxu0 %v428
    %462 = vmatpush.msra.mxu0 %v427
    %463 = vmatmul.f32.gmra.mxu0 %v425
    %v464 = vpop.f32.mrf.mxu0
    %v465 = vadd.f32 %v445, %v464
    %466 = vmatmul.f32.gmra.mxu0 %v426
    %v467 = vpop.f32.mrf.mxu0
    %v468 = vadd.f32 %v445, %v467
    %469 = vdwg.mxu0
    %v470 = vxor.u32 %v465, 2147483648
    %v471 = vxor.u32 %v468, 2147483648
    %v472 = vmul.f32 %v470, 1.442695
    %v473 = vpow.pop %v472
    %v474 = vmul.f32 %v471, 1.442695
    %v475 = vpow.pop %v474
    %v476 = vadd.f32 %v473, 1.0
    %v477 = vadd.f32 %v475, 1.0
    %v478 = vrcp.pop %v476
    %v479 = vmul.f32 %v476, %v478
    %v480 = vsub.f32 1.0, %v479
    %v481 = vmul.f32 %v478, %v480
    %v482 = vadd.f32 %v478, %v481
    %vm483 = vweird.f32 %v476
    %vm484 = vweird.f32 %v478
    %vm485 = vmor %vm483, %vm484
    %v486 = vsel %vm485, %v478, %v482
    %v487 = vand.u32 2147483647, %v476
    %vm488 = vcmp.eq.f32.partialorder %v487, 8.507059e+37
    %v489 = vand.u32 %v476, 2147483648
    %v490 = vor.u32 1.1754944e-38, %v489
    %v491 = vsel %vm488, %v490, %v486
    %v492 = vmul.f32 1.0, %v491
    %v493 = vrcp.pop %v477
    %v494 = vmul.f32 %v477, %v493
    %v495 = vsub.f32 1.0, %v494
    %v496 = vmul.f32 %v493, %v495
    %v497 = vadd.f32 %v493, %v496
    %vm498 = vweird.f32 %v477
    %vm499 = vweird.f32 %v493
    %vm500 = vmor %vm498, %vm499
    %v501 = vsel %vm500, %v493, %v497
    %v502 = vand.u32 2147483647, %v477
    %vm503 = vcmp.eq.f32.partialorder %v502, 8.507059e+37
    %v504 = vand.u32 %v477, 2147483648
    %v505 = vor.u32 1.1754944e-38, %v504
    %v506 = vsel %vm503, %v505, %v501
    %v507 = vmul.f32 1.0, %v506
    %508 = vst [vmem:[#allocation16] sm:$0xff] %v492
    %509 = vst [vmem:[#allocation16 + $0x8] sm:$0xff] %v507
    // Predicated region
    $region78: #{mlp_2_input_forward.1} parent=1 // pred_check
      _
    $region79: #{mlp_2_input_forward.1} parent=1 // pred_check_branch
      %511 = sbr.rel (0) target = $region81
    $region80: #{mlp_2_input_forward.1} parent=1 // pred_region
      %513 = vsyncadd [#allocation4], 128
      %s514 = sshll.u32 [#allocation16], 4
      %s515 = int_to_ptr.vmem [resolvable:$true] %s514
      %s516 = sshll.u32 %s11, 4
      %s517 = int_to_ptr.hbm [resolvable:$true] %s516
      %522 = dma.vmem_to_hbm [thread:$0]  %s515, 128, %s517, [#allocation4], 128, 128, 8
    $region81: #{mlp_2_input_forward.1} parent=1 // pred_fallthru
      _
    // Predicated region
    $region82: #{mlp_2_input_forward.1} parent=1 // pred_check
      _
    $region83: #{mlp_2_input_forward.1} parent=1 // pred_check_branch
      %524 = sbr.rel (0) target = $region85
    $region84: #{mlp_2_input_forward.1} parent=1 // pred_region
      %526 = dma.done [#allocation4], 256
    $region85: #{mlp_2_input_forward.1} parent=1 // pred_fallthru
      _
    %527 = vsyncpa [#allocation3], 1
    %528 = vsyncpa [#allocation6], 1
    %529 = vsyncpa [#allocation9], 1
    %530 = vsyncpa [#allocation12], 1
    %531 = vsyncpa [#allocation15], 1
    %532 = vsyncpa [#allocation4], 1

</llo_original>
